<compile_context>
chip_gen: v7x
topology: tpu7x:2x2x1
jax: 0.10.0
libtpu: 0.0.40
codegen_flags: <defaults>
</compile_context>

<pallas_src>
import itertools

import numpy as np
import jax
import jax.numpy as jnp
from jax.experimental import pallas as pl
from jax.experimental.pallas import tpu as pltpu


LANE = 128


def _round_up(n, m):
    return ((n + m - 1) // m) * m


# ----------------------------------------------------------------------------- host precompute
def fftfreqs_np(res):
    """Un-scaled frequency grid of shape (r0, ..., r_{d-1}//2+1, dim), float64."""
    freqs = []
    for r in res[:-1]:
        freqs.append(np.fft.fftfreq(r, d=1.0 / r))
    freqs.append(np.fft.rfftfreq(res[-1], d=1.0 / res[-1]))
    return np.stack(np.meshgrid(*freqs, indexing="ij"), axis=-1)


def poisson_spectral_factor_np(res, sig, rows, lane=LANE):
    """omg_k = (2*pi*f_k) * G / (Lap + 1e-6), DC bin zeroed.

    Returned channel-major and lane-tiled: shape (3, rows, lane) float32, zero padded past
    the true spectrum length (so padded lanes contribute exactly zero in the kernel).
    """
    om = fftfreqs_np(res)                                       # (r0, r1, r2h, 3) f64
    dis = np.sqrt(np.sum(om ** 2, axis=-1))
    G = np.exp(-0.5 * ((sig * 2.0 * dis / res[0]) ** 2))        # Gaussian spectral filter
    omega = om * (2.0 * np.pi)
    lap = -np.sum(omega ** 2, axis=-1)                          # (r0, r1, r2h)
    gd = G / (lap + 1e-6)
    gd[(0,) * len(res)] = 0.0                                   # zero DC bin (tiling-safe mask)
    omg = (omega * gd[..., None]).astype(np.float32)            # (r0, r1, r2h, 3)
    M = int(np.prod(omg.shape[:-1]))
    omg = np.ascontiguousarray(omg.reshape(M, 3).T)             # (3, M)
    Mp = rows * lane
    if Mp != M:
        omg = np.pad(omg, ((0, 0), (0, Mp - M)))
    return omg.reshape(3, rows, lane)


def _choose_row_tile(R, B, target_rows=256):
    """Rows-per-tile: multiple of 8, ~32K elements (128 KiB) per channel slab, and keep the
    total grid at >= 2 steps so v7x's two TensorCores both get work (no-op on v5e/v6e)."""
    tr = max(8, min(target_rows, _round_up(R, 8)))
    if B * pl.cdiv(R, tr) < 2 and R > 8:
        tr = max(8, _round_up(pl.cdiv(R, 2), 8))
    return tr


# ----------------------------------------------------------------------------- JAX glue ops
def point_rasterize(pts, vals, size):
    """Trilinear splat. pts (B,Np,3) in [0,1], vals (B,Np,F) -> (B, F, r0, r1, r2)."""
    B, Np, dim = pts.shape
    F = vals.shape[-1]
    size_arr = jnp.asarray(size, dtype=pts.dtype)
    cubesize = 1.0 / size_arr
    ind0 = jnp.floor(pts / cubesize)                        # lower corner (float)
    ind1 = jnp.mod(jnp.ceil(pts / cubesize), size_arr)      # upper corner, periodic wrap
    xyz0 = ind0 * cubesize
    xyz1 = (ind0 + 1.0) * cubesize
    ind0i = ind0.astype(jnp.int32)
    ind1i = ind1.astype(jnp.int32)
    b_idx = jnp.broadcast_to(jnp.arange(B)[:, None], (B, Np))

    raster = jnp.zeros((B,) + tuple(size) + (F,), dtype=vals.dtype)
    for corner in itertools.product((0, 1), repeat=dim):
        idx = []
        w = jnp.ones((B, Np), dtype=pts.dtype)
        for d, c in enumerate(corner):
            idx.append(ind0i[..., d] if c == 0 else ind1i[..., d])
            pos_opp = xyz1[..., d] if c == 0 else xyz0[..., d]   # opposite corner
            w = w * jnp.abs(pts[..., d] - pos_opp) / cubesize[d]
        raster = raster.at[b_idx, idx[0], idx[1], idx[2], :].add(w[..., None] * vals)
    return jnp.transpose(raster, (0, 4, 1, 2, 3))


def grid_interp(grid, pts):
    """Trilinear gather. grid (B, r0, r1, r2, F), pts (B,Np,3) in [0,1] -> (B, Np, F)."""
    B = grid.shape[0]
    size_arr = jnp.asarray(grid.shape[1:-1], dtype=pts.dtype)
    cubesize = 1.0 / size_arr
    ind0 = jnp.floor(pts / cubesize)
    ind1 = jnp.mod(jnp.ceil(pts / cubesize), size_arr)
    xyz0 = ind0 * cubesize
    xyz1 = (ind0 + 1.0) * cubesize
    ind0i = ind0.astype(jnp.int32)
    ind1i = ind1.astype(jnp.int32)
    b_idx = jnp.broadcast_to(jnp.arange(B)[:, None], (B, pts.shape[1]))

    out = jnp.zeros((B, pts.shape[1], grid.shape[-1]), dtype=grid.dtype)
    for corner in itertools.product((0, 1), repeat=3):
        idx = []
        w = jnp.ones((B, pts.shape[1]), dtype=pts.dtype)
        for d, c in enumerate(corner):
            idx.append(ind0i[..., d] if c == 0 else ind1i[..., d])
            pos_opp = xyz1[..., d] if c == 0 else xyz0[..., d]
            w = w * jnp.abs(pts[..., d] - pos_opp) / cubesize[d]
        lat = grid[b_idx, idx[0], idx[1], idx[2], :]
        out = out + lat * w[..., None]
    return out


# ----------------------------------------------------------------------------- Pallas kernel
def _spectral_kernel(sr_ref, si_ref, og_ref, phir_ref, phii_ref):
    """Per (TR, 128) row-tile spectral Poisson solve for one batch element.

    phir =  sum_k Im(ras_s)_k * omg_k
    phii = -sum_k Re(ras_s)_k * omg_k
    with omg_k = (2*pi*f_k) * G / (Lap + 1e-6) precomputed on the host (DC bin zeroed).
    The 3-term channel sum is unrolled multiply-adds over sublane-dense (TR, 128) slabs
    (no cross-sublane XLU reduce); the kernel is purely HBM-bandwidth-bound.
    """
    og0, og1, og2 = og_ref[0], og_ref[1], og_ref[2]               # (TR, 128) each
    phir_ref[...] = si_ref[0] * og0 + si_ref[1] * og1 + si_ref[2] * og2
    phii_ref[...] = -(sr_ref[0] * og0 + sr_ref[1] * og1 + sr_ref[2] * og2)


def spectral_solve(sr, si, omg, tr):
    """sr, si: (B, 3, R, 128) f32; omg: (3, R, 128) f32 -> (phir, phii) each (B, R, 128)."""
    B, C, R, L = sr.shape
    grid = (B, pl.cdiv(R, tr))          # partial edge block handled by Pallas masking
    spec_in = pl.BlockSpec((None, C, tr, L), lambda b, i: (b, 0, i, 0))
    spec_og = pl.BlockSpec((C, tr, L), lambda b, i: (0, i, 0))
    spec_out = pl.BlockSpec((None, tr, L), lambda b, i: (b, i, 0))
    return pl.pallas_call(
        _spectral_kernel,
        out_shape=[jax.ShapeDtypeStruct((B, R, L), jnp.float32),
                   jax.ShapeDtypeStruct((B, R, L), jnp.float32)],
        grid=grid,
        in_specs=[spec_in, spec_in, spec_og],
        out_specs=[spec_out, spec_out],
        compiler_params=pltpu.CompilerParams(
            dimension_semantics=("parallel", "parallel")),
    )(sr, si, omg)


# ----------------------------------------------------------------------------- DPSR module
class DPSRPallas:
    def __init__(self, res, sig=10, scale=True, shift=True, target_tile_rows=256):
        assert len(res) == 3, "forward pass hardcodes 3-D FFTs (as in the PyTorch module)"
        self.res = tuple(res)
        self.sig = sig
        self.scale = scale
        self.shift = shift
        self.target_tile_rows = target_tile_rows

        r0, r1, r2 = self.res
        r2h = r2 // 2 + 1
        self.M = r0 * r1 * r2h                       # flattened half-spectrum size
        self.Mp = _round_up(self.M, LANE)            # no-op for power-of-two resolutions
        self.R = self.Mp // LANE                     # lane-tiled row count

        # Host-precomputed, already channel-major and (R, 128)-tiled.
        self.omg = jnp.asarray(poisson_spectral_factor_np(self.res, sig, self.R))

    def __call__(self, V, N):
        assert V.shape == N.shape
        r0, r1, r2 = self.res
        r2h = r2 // 2 + 1
        B = V.shape[0]

        V = (V + 1.0) / 2.0
        ras_p = point_rasterize(V, N, self.res)                    # (B, 3, r0, r1, r2)

        # 3-D real FFT of the rasterized normal field (XLA FFT library op).
        ras_s = jnp.fft.rfftn(ras_p, axes=(2, 3, 4))               # (B, 3, r0, r1, r2h) c64
        # Keep (B, 3, ...) order — no moveaxis; real/imag extraction fuses with the reshape.
        sr = jnp.real(ras_s).astype(jnp.float32).reshape(B, 3, self.M)
        si = jnp.imag(ras_s).astype(jnp.float32).reshape(B, 3, self.M)
        if self.Mp != self.M:                                      # rare: M not 128-multiple
            pad = self.Mp - self.M
            sr = jnp.pad(sr, ((0, 0), (0, 0), (0, pad)))
            si = jnp.pad(si, ((0, 0), (0, 0), (0, pad)))
        sr = sr.reshape(B, 3, self.R, LANE)
        si = si.reshape(B, 3, self.R, LANE)

        tr = _choose_row_tile(self.R, B, self.target_tile_rows)
        phir, phii = spectral_solve(sr, si, self.omg, tr)          # Pallas hot path
        Phi = jax.lax.complex(phir.reshape(B, self.Mp)[:, :self.M],
                              phii.reshape(B, self.Mp)[:, :self.M])
        Phi = Phi.reshape(B, r0, r1, r2h)
        phi = jnp.fft.irfftn(Phi, s=self.res, axes=(1, 2, 3)).astype(jnp.float32)

        if self.shift or self.scale:
            if self.shift:
                fv = grid_interp(phi[..., None], V)[..., 0]        # (B, Np)
                offset = jnp.mean(fv, axis=-1)                     # (B,)
            else:
                offset = jnp.zeros((B,), dtype=phi.dtype)
            if self.scale:
                fv0 = phi[:, 0, 0, 0] - offset                     # grid-origin value post-shift
                inv = 0.5 / jnp.abs(fv0)                           # matches reference (no eps)
                scale_b = -inv
                bias_b = offset * inv
            else:                                                   # shift only
                scale_b = jnp.ones_like(offset)
                bias_b = -offset
            # 2-op per-batch affine: single XLA elementwise fusion (one read / one write);
            # a dedicated pallas_call would only add launch + pad/slice overhead.
            phi = phi * scale_b[:, None, None, None] + bias_b[:, None, None, None]
        return phi


# ----------------------------------------------------------------------------- demo
if __name__ == "__main__":
    key = jax.random.PRNGKey(0)
    kv, kn = jax.random.split(key)

    B, Np = 2, 8
    res = (32, 32, 32)   # small, but the spectral grid still has >= 2 tiles (one per batch)
    V = jax.random.uniform(kv, (B, Np, 3), minval=-0.9, maxval=0.9, dtype=jnp.float32)
    N = jax.random.normal(kn, (B, Np, 3), dtype=jnp.float32)

    model = DPSRPallas(res=res, sig=10, scale=True, shift=True)

    @jax.jit
    def run(V, N):
        return model(V, N)

    phi = jax.block_until_ready(run(V, N))
    assert phi.shape == (B,) + res, phi.shape
    assert phi.dtype == jnp.float32
    print("KERNEL_OK")
</pallas_src>

<mosaic_0001>
module attributes {stable_mosaic.version = 11 : i64} {
  func.func @_spectral_kernel(%arg0: i32, %arg1: i32, %arg2: memref<1x3x136x128xf32, #tpu.memory_space<vmem>>, %arg3: memref<1x3x136x128xf32, #tpu.memory_space<vmem>>, %arg4: memref<3x136x128xf32, #tpu.memory_space<vmem>>, %arg5: memref<1x136x128xf32, #tpu.memory_space<vmem>>, %arg6: memref<1x136x128xf32, #tpu.memory_space<vmem>>) attributes {dimension_semantics = [#tpu.dimension_semantics<parallel>, #tpu.dimension_semantics<parallel>], iteration_bounds = array<i64: 2, 1>, scalar_prefetch = 0 : i64, scratch_operands = 0 : i64, tpu.core_type = #tpu.core_type<tc>, window_params = [{transform_indices = @transform_0, window_bounds = array<i64: 1, 3, 136, 128>}, {transform_indices = @transform_1, window_bounds = array<i64: 1, 3, 136, 128>}, {transform_indices = @transform_2, window_bounds = array<i64: 3, 136, 128>}, {transform_indices = @transform_3, window_bounds = array<i64: 1, 136, 128>}, {transform_indices = @transform_4, window_bounds = array<i64: 1, 136, 128>}]} {
    %c0 = arith.constant 0 : index
    %c0_0 = arith.constant 0 : index
    %c0_1 = arith.constant 0 : index
    %0 = vector.load %arg4[%c0, %c0_0, %c0_1] : memref<3x136x128xf32, #tpu.memory_space<vmem>>, vector<1x136x128xf32>
    %1 = vector.shape_cast %0 : vector<1x136x128xf32> to vector<136x128xf32>
    %c1 = arith.constant 1 : index
    %c0_2 = arith.constant 0 : index
    %c0_3 = arith.constant 0 : index
    %2 = vector.load %arg4[%c1, %c0_2, %c0_3] : memref<3x136x128xf32, #tpu.memory_space<vmem>>, vector<1x136x128xf32>
    %3 = vector.shape_cast %2 : vector<1x136x128xf32> to vector<136x128xf32>
    %c2 = arith.constant 2 : index
    %c0_4 = arith.constant 0 : index
    %c0_5 = arith.constant 0 : index
    %4 = vector.load %arg4[%c2, %c0_4, %c0_5] : memref<3x136x128xf32, #tpu.memory_space<vmem>>, vector<1x136x128xf32>
    %5 = vector.shape_cast %4 : vector<1x136x128xf32> to vector<136x128xf32>
    %c0_6 = arith.constant 0 : index
    %c0_7 = arith.constant 0 : index
    %c0_8 = arith.constant 0 : index
    %c0_9 = arith.constant 0 : index
    %6 = vector.load %arg3[%c0_6, %c0_7, %c0_8, %c0_9] : memref<1x3x136x128xf32, #tpu.memory_space<vmem>>, vector<1x1x136x128xf32>
    %7 = vector.shape_cast %6 : vector<1x1x136x128xf32> to vector<136x128xf32>
    %8 = arith.mulf %7, %1 : vector<136x128xf32>
    %c0_10 = arith.constant 0 : index
    %c1_11 = arith.constant 1 : index
    %c0_12 = arith.constant 0 : index
    %c0_13 = arith.constant 0 : index
    %9 = vector.load %arg3[%c0_10, %c1_11, %c0_12, %c0_13] : memref<1x3x136x128xf32, #tpu.memory_space<vmem>>, vector<1x1x136x128xf32>
    %10 = vector.shape_cast %9 : vector<1x1x136x128xf32> to vector<136x128xf32>
    %11 = arith.mulf %10, %3 : vector<136x128xf32>
    %12 = arith.addf %8, %11 : vector<136x128xf32>
    %c0_14 = arith.constant 0 : index
    %c2_15 = arith.constant 2 : index
    %c0_16 = arith.constant 0 : index
    %c0_17 = arith.constant 0 : index
    %13 = vector.load %arg3[%c0_14, %c2_15, %c0_16, %c0_17] : memref<1x3x136x128xf32, #tpu.memory_space<vmem>>, vector<1x1x136x128xf32>
    %14 = vector.shape_cast %13 : vector<1x1x136x128xf32> to vector<136x128xf32>
    %15 = arith.mulf %14, %5 : vector<136x128xf32>
    %16 = arith.addf %12, %15 : vector<136x128xf32>
    %c0_18 = arith.constant 0 : index
    %c0_19 = arith.constant 0 : index
    %c0_20 = arith.constant 0 : index
    %17 = vector.load %arg5[%c0_18, %c0_19, %c0_20] : memref<1x136x128xf32, #tpu.memory_space<vmem>>, vector<1x136x128xf32>
    %18 = vector.shape_cast %17 : vector<1x136x128xf32> to vector<136x128xf32>
    %19 = vector.shape_cast %16 : vector<136x128xf32> to vector<1x136x128xf32>
    tpu.vector_store %arg5[%c0_18, %c0_19, %c0_20], %19 {strides = array<i32>} : memref<1x136x128xf32, #tpu.memory_space<vmem>>, vector<1x136x128xf32>,
    %c0_21 = arith.constant 0 : index
    %c0_22 = arith.constant 0 : index
    %c0_23 = arith.constant 0 : index
    %c0_24 = arith.constant 0 : index
    %20 = vector.load %arg2[%c0_21, %c0_22, %c0_23, %c0_24] : memref<1x3x136x128xf32, #tpu.memory_space<vmem>>, vector<1x1x136x128xf32>
    %21 = vector.shape_cast %20 : vector<1x1x136x128xf32> to vector<136x128xf32>
    %22 = arith.mulf %21, %1 : vector<136x128xf32>
    %c0_25 = arith.constant 0 : index
    %c1_26 = arith.constant 1 : index
    %c0_27 = arith.constant 0 : index
    %c0_28 = arith.constant 0 : index
    %23 = vector.load %arg2[%c0_25, %c1_26, %c0_27, %c0_28] : memref<1x3x136x128xf32, #tpu.memory_space<vmem>>, vector<1x1x136x128xf32>
    %24 = vector.shape_cast %23 : vector<1x1x136x128xf32> to vector<136x128xf32>
    %25 = arith.mulf %24, %3 : vector<136x128xf32>
    %26 = arith.addf %22, %25 : vector<136x128xf32>
    %c0_29 = arith.constant 0 : index
    %c2_30 = arith.constant 2 : index
    %c0_31 = arith.constant 0 : index
    %c0_32 = arith.constant 0 : index
    %27 = vector.load %arg2[%c0_29, %c2_30, %c0_31, %c0_32] : memref<1x3x136x128xf32, #tpu.memory_space<vmem>>, vector<1x1x136x128xf32>
    %28 = vector.shape_cast %27 : vector<1x1x136x128xf32> to vector<136x128xf32>
    %29 = arith.mulf %28, %5 : vector<136x128xf32>
    %30 = arith.addf %26, %29 : vector<136x128xf32>
    %cst = arith.constant 0.000000e+00 : f32
    %31 = vector.broadcast %cst : f32 to vector<136x128xf32>
    %32 = arith.subf %31, %30 : vector<136x128xf32>
    %c0_33 = arith.constant 0 : index
    %c0_34 = arith.constant 0 : index
    %c0_35 = arith.constant 0 : index
    %33 = vector.load %arg6[%c0_33, %c0_34, %c0_35] : memref<1x136x128xf32, #tpu.memory_space<vmem>>, vector<1x136x128xf32>
    %34 = vector.shape_cast %33 : vector<1x136x128xf32> to vector<136x128xf32>
    %35 = vector.shape_cast %32 : vector<136x128xf32> to vector<1x136x128xf32>
    tpu.vector_store %arg6[%c0_33, %c0_34, %c0_35], %35 {strides = array<i32>} : memref<1x136x128xf32, #tpu.memory_space<vmem>>, vector<1x136x128xf32>,
    return
  }
  func.func @transform_0(%arg0: i32, %arg1: i32) -> (i32, i32, i32, i32) {
    %c0_i32 = arith.constant 0 : i32
    %c0_i32_0 = arith.constant 0 : i32
    %c0_i32_1 = arith.constant 0 : i32
    return %arg0, %c0_i32, %arg1, %c0_i32_0 : i32, i32, i32, i32
  }
  func.func @transform_1(%arg0: i32, %arg1: i32) -> (i32, i32, i32, i32) {
    %c0_i32 = arith.constant 0 : i32
    %c0_i32_0 = arith.constant 0 : i32
    %c0_i32_1 = arith.constant 0 : i32
    return %arg0, %c0_i32, %arg1, %c0_i32_0 : i32, i32, i32, i32
  }
  func.func @transform_2(%arg0: i32, %arg1: i32) -> (i32, i32, i32) {
    %c0_i32 = arith.constant 0 : i32
    %c0_i32_0 = arith.constant 0 : i32
    %c0_i32_1 = arith.constant 0 : i32
    return %c0_i32, %arg1, %c0_i32_0 : i32, i32, i32
  }
  func.func @transform_3(%arg0: i32, %arg1: i32) -> (i32, i32, i32) {
    %c0_i32 = arith.constant 0 : i32
    %c0_i32_0 = arith.constant 0 : i32
    return %arg0, %arg1, %c0_i32 : i32, i32, i32
  }
  func.func @transform_4(%arg0: i32, %arg1: i32) -> (i32, i32, i32) {
    %c0_i32 = arith.constant 0 : i32
    %c0_i32_0 = arith.constant 0 : i32
    return %arg0, %arg1, %c0_i32 : i32, i32, i32
  }
}

</mosaic_0001>

<llo_original>
// kernel: run.1
$region0: #{run.1}
  #allocation0 [shape = 'u32[]', space=smem, size = 0x4, offset = 0x4, fixed_abs, tag = 'smem constant byte address 0x4 - core index']
  #allocation1 [shape = 'u32[144,128]{1,0:T(1,128)}', space=vmem, size = 0x12000, scoped, tag = 'internal scratch']
  %s0 = inlined_call_operand.vmem [shape: f32[2,3,136,128], index: 0, kind: input, shape index: {}]
  %s1 = inlined_call_operand.vmem [shape: f32[2,3,136,128], index: 1, kind: input, shape index: {}]
  %s2 = inlined_call_operand.vmem [shape: f32[3,136,128], index: 2, kind: input, shape index: {}]
  %s3 = inlined_call_operand.vmem [shape: f32[2,136,128], index: 3, kind: output, shape index: {0}]
  %s4 = inlined_call_operand.vmem [shape: f32[2,136,128], index: 4, kind: output, shape index: {1}]
  %5 = xla_tuple %s3, %s4
  %s6 = sld [smem:[#allocation0]]
  $region53: #{run.1} parent=0
    _
  %s8 = ssub.s32 1, %s6
  %s9 = scalar_select 0, %s8, %s6
  loop: start=0, step=1, limit=4
  $region2: #{run.1} parent=0 // loop_pre_header
    _
  $region3: #{run.1} parent=0 // loop_header
    %s11 = sphi 0, %s15
    %p12 = scmp.ge.s32.totalorder %s11, 4
    %s18 = sphi 0, %s30
    %s19 = sphi 0, %s26
    %s20 = sphi 0, %s18
    %s21 = sphi 0, %s19
    %s22 = sphi 0, %s20
    %s23 = sphi 0, %s21
    %s35 = sphi 0, %s37
    %s38 = sphi 0, %s35
    %s39 = sphi 0, %s38
    %s55 = sphi 0, %s39
    %s63 = sphi 0, %s65
    %s66 = sphi 0, %s63
    %s67 = sphi 0, %s66
    %s83 = sphi 0, %s67
    %s89 = sphi 0, %s91
    %s92 = sphi 0, %s89
    %s93 = sphi 0, %s92
    %s109 = sphi 0, %s93
    %s117 = sphi 0, %s119
    %s120 = sphi 0, %s117
    %s121 = sphi 0, %s120
    %s137 = sphi 0, %s121
    %s145 = sphi 0, %s147
    %s148 = sphi 0, %s145
    %s149 = sphi 0, %s148
    %s165 = sphi 0, %s149
  $region4: #{run.1} parent=0 // loop_header_branch
    %14 = sbr.rel (%p12) target = $region8
  $region5: #{run.1} parent=0 // loop_body
    %s16 = ssub.s32 %s11, 1
    %s17 = ssub.s32 %s11, 2
    %s24 = sadd.s32 1, %s19
    %p25 = scmp.ge.s32.totalorder %s24, 1
    %s26 = scalar_select %p25, 0, %s24
    %s27 = sadd.s32 1, %s18
    %s28 = scalar_select %p25, %s27, %s18
    %p29 = scmp.ge.s32.totalorder %s28, 2
    %s30 = scalar_select %p29, 0, %s28
    %s31 = ssub.s32 %s18, %s30
    %s32 = ssub.s32 %s19, %s26
    %s33 = sor.u32 %s31, %s32
    %p34 = scmp.eq.s32.totalorder %s33, 0
    %s36 = sadd.s32 %s35, 1
    %s37 = scalar_select %p34, %s35, %s36
    %p40 = pneg %p34
    %p41 = scmp.eq.s32.totalorder %s11, 1
    %p42 = por %p40, %p41
    %p43 = scmp.ne.s32.totalorder %s35, %s38
    %p44 = scmp.eq.s32.totalorder %s11, 0
    %p45 = por %p43, %p44
    %p46 = scmp.ne.s32.totalorder %s35, %s38
    %p47 = scmp.eq.s32.totalorder %s16, 1
    %p48 = por %p46, %p47
    %p49 = scmp.ne.s32.totalorder %s38, %s39
    %p50 = scmp.eq.s32.totalorder %s16, 0
    %p51 = por %p49, %p50
    %p52 = scmp.ne.s32.totalorder %s38, %s39
    %p53 = scmp.eq.s32.totalorder %s17, 1
    %p54 = por %p52, %p53
    %p56 = scmp.ne.s32.totalorder %s39, %s55
    %p57 = scmp.eq.s32.totalorder %s17, 0
    %p58 = por %p56, %p57
    %s59 = ssub.s32 %s18, %s30
    %s60 = ssub.s32 %s19, %s26
    %s61 = sor.u32 %s59, %s60
    %p62 = scmp.eq.s32.totalorder %s61, 0
    %s64 = sadd.s32 %s63, 1
    %s65 = scalar_select %p62, %s63, %s64
    %p68 = pneg %p62
    %p69 = scmp.eq.s32.totalorder %s11, 1
    %p70 = por %p68, %p69
    %p71 = scmp.ne.s32.totalorder %s63, %s66
    %p72 = scmp.eq.s32.totalorder %s11, 0
    %p73 = por %p71, %p72
    %p74 = scmp.ne.s32.totalorder %s63, %s66
    %p75 = scmp.eq.s32.totalorder %s16, 1
    %p76 = por %p74, %p75
    %p77 = scmp.ne.s32.totalorder %s66, %s67
    %p78 = scmp.eq.s32.totalorder %s16, 0
    %p79 = por %p77, %p78
    %p80 = scmp.ne.s32.totalorder %s66, %s67
    %p81 = scmp.eq.s32.totalorder %s17, 1
    %p82 = por %p80, %p81
    %p84 = scmp.ne.s32.totalorder %s67, %s83
    %p85 = scmp.eq.s32.totalorder %s17, 0
    %p86 = por %p84, %p85
    %s87 = ssub.s32 %s19, %s26
    %p88 = scmp.eq.s32.totalorder %s87, 0
    %s90 = sadd.s32 %s89, 1
    %s91 = scalar_select %p88, %s89, %s90
    %p94 = pneg %p88
    %p95 = scmp.eq.s32.totalorder %s11, 1
    %p96 = por %p94, %p95
    %p97 = scmp.ne.s32.totalorder %s89, %s92
    %p98 = scmp.eq.s32.totalorder %s11, 0
    %p99 = por %p97, %p98
    %p100 = scmp.ne.s32.totalorder %s89, %s92
    %p101 = scmp.eq.s32.totalorder %s16, 1
    %p102 = por %p100, %p101
    %p103 = scmp.ne.s32.totalorder %s92, %s93
    %p104 = scmp.eq.s32.totalorder %s16, 0
    %p105 = por %p103, %p104
    %p106 = scmp.ne.s32.totalorder %s92, %s93
    %p107 = scmp.eq.s32.totalorder %s17, 1
    %p108 = por %p106, %p107
    %p110 = scmp.ne.s32.totalorder %s93, %s109
    %p111 = scmp.eq.s32.totalorder %s17, 0
    %p112 = por %p110, %p111
    %s113 = ssub.s32 %s18, %s30
    %s114 = ssub.s32 %s19, %s26
    %s115 = sor.u32 %s113, %s114
    %p116 = scmp.eq.s32.totalorder %s115, 0
    %s118 = sadd.s32 %s117, 1
    %s119 = scalar_select %p116, %s117, %s118
    %p122 = pneg %p116
    %p123 = scmp.eq.s32.totalorder %s11, 1
    %p124 = por %p122, %p123
    %p125 = scmp.ne.s32.totalorder %s117, %s120
    %p126 = scmp.eq.s32.totalorder %s11, 0
    %p127 = por %p125, %p126
    %p128 = scmp.ne.s32.totalorder %s117, %s120
    %p129 = scmp.eq.s32.totalorder %s16, 1
    %p130 = por %p128, %p129
    %p131 = scmp.ne.s32.totalorder %s120, %s121
    %p132 = scmp.eq.s32.totalorder %s16, 0
    %p133 = por %p131, %p132
    %p134 = scmp.ne.s32.totalorder %s120, %s121
    %p135 = scmp.eq.s32.totalorder %s17, 1
    %p136 = por %p134, %p135
    %p138 = scmp.ne.s32.totalorder %s121, %s137
    %p139 = scmp.eq.s32.totalorder %s17, 0
    %p140 = por %p138, %p139
    %s141 = ssub.s32 %s18, %s30
    %s142 = ssub.s32 %s19, %s26
    %s143 = sor.u32 %s141, %s142
    %p144 = scmp.eq.s32.totalorder %s143, 0
    %s146 = sadd.s32 %s145, 1
    %s147 = scalar_select %p144, %s145, %s146
    %p150 = pneg %p144
    %p151 = scmp.eq.s32.totalorder %s11, 1
    %p152 = por %p150, %p151
    %p153 = scmp.ne.s32.totalorder %s145, %s148
    %p154 = scmp.eq.s32.totalorder %s11, 0
    %p155 = por %p153, %p154
    %p156 = scmp.ne.s32.totalorder %s145, %s148
    %p157 = scmp.eq.s32.totalorder %s16, 1
    %p158 = por %p156, %p157
    %p159 = scmp.ne.s32.totalorder %s148, %s149
    %p160 = scmp.eq.s32.totalorder %s16, 0
    %p161 = por %p159, %p160
    %p162 = scmp.ne.s32.totalorder %s148, %s149
    %p163 = scmp.eq.s32.totalorder %s17, 1
    %p164 = por %p162, %p163
    %p166 = scmp.ne.s32.totalorder %s149, %s165
    %p167 = scmp.eq.s32.totalorder %s17, 0
    %p168 = por %p166, %p167
    %p169 = scmp.le.s32.totalorder 1, %s11
    %p170 = scmp.lt.s32.totalorder %s11, 3
    %p171 = pnand %p169, %p170
    %p172 = pneg %p171
    // Predicated region
    $region9: #{run.1} parent=5 // pred_check
      _
    $region10: #{run.1} parent=5 // pred_check_branch
      %174 = sbr.rel (%p171) target = $region12
    $region11: #{run.1} parent=5 // pred_region
      %s175 = ssub.s32 %s11, 1
      // Predicated region
      $region13: #{run.1} parent=11 // pred_check
        %p176 = pneg %p105
      $region14: #{run.1} parent=11 // pred_check_branch
        %178 = sbr.rel (%p176) target = $region16
      $region15: #{run.1} parent=11 // pred_region
        %s179 = smul.u32 17, %s21
        %p180 = scmp.lt.s32.totalorder %s179, 16
        %s181 = scalar_select %p180, %s179, 16
        %s182 = smul.addr %s181, 8
        %s183 = scalar_lea.vmem %s2, %s182
        %s184 = smul.u32 17, %s21
      $region16: #{run.1} parent=11 // pred_fallthru
        _
    $region12: #{run.1} parent=5 // pred_fallthru
      _
    %p185 = scmp.lt.s32.totalorder %s11, 2
    // Predicated region
    $region17: #{run.1} parent=5 // pred_check
      %p186 = pneg %p185
    $region18: #{run.1} parent=5 // pred_check_branch
      %188 = sbr.rel (%p186) target = $region20
    $region19: #{run.1} parent=5 // pred_region
      // Predicated region
      $region21: #{run.1} parent=19 // pred_check
        %p189 = pneg %p45
      $region22: #{run.1} parent=19 // pred_check_branch
        %191 = sbr.rel (%p189) target = $region24
      $region23: #{run.1} parent=19 // pred_region
        %s192 = smul.u32 17, %s19
        %p193 = scmp.lt.s32.totalorder %s18, 1
        %s194 = scalar_select %p193, %s18, 1
        %p195 = scmp.lt.s32.totalorder %s192, 16
        %s196 = scalar_select %p195, %s192, 16
        %s197 = smul.addr %s194, 51
        %s198 = sadd.s32 %s196, %s197
        %s199 = smul.addr %s198, 8
        %s200 = scalar_lea.vmem %s0, %s199
        %s201 = smul.u32 17, %s19
      $region24: #{run.1} parent=19 // pred_fallthru
        _
      // Predicated region
      $region25: #{run.1} parent=19 // pred_check
        %p202 = pneg %p73
      $region26: #{run.1} parent=19 // pred_check_branch
        %204 = sbr.rel (%p202) target = $region28
      $region27: #{run.1} parent=19 // pred_region
        %s205 = smul.u32 17, %s19
        %p206 = scmp.lt.s32.totalorder %s18, 1
        %s207 = scalar_select %p206, %s18, 1
        %p208 = scmp.lt.s32.totalorder %s205, 16
        %s209 = scalar_select %p208, %s205, 16
        %s210 = smul.addr %s207, 51
        %s211 = sadd.s32 %s209, %s210
        %s212 = smul.addr %s211, 8
        %s213 = scalar_lea.vmem %s1, %s212
        %s214 = smul.u32 17, %s19
      $region28: #{run.1} parent=19 // pred_fallthru
        _
    $region20: #{run.1} parent=5 // pred_fallthru
      _
    %p215 = scmp.le.s32.totalorder 1, %s11
    %p216 = scmp.lt.s32.totalorder %s11, 3
    %p217 = pnand %p215, %p216
    %p218 = pneg %p217
    // Predicated region
    $region29: #{run.1} parent=5 // pred_check
      _
    $region30: #{run.1} parent=5 // pred_check_branch
      %220 = sbr.rel (%p217) target = $region32
    $region31: #{run.1} parent=5 // pred_region
      %s221 = ssub.s32 %s11, 1
      %s222 = smul.u32 17, %s21
      %p223 = scmp.lt.s32.totalorder %s20, 1
      %s224 = scalar_select %p223, %s20, 1
      %p225 = scmp.lt.s32.totalorder %s222, 16
      %s226 = scalar_select %p225, %s222, 16
      %s227 = smul.addr %s224, 51
      %s228 = sadd.s32 %s226, %s227
      %s229 = smul.addr %s228, 8
      %s230 = scalar_lea.vmem %s0, %s229
      %p231 = pneg %p51
      %p232 = pneg %p48
      %s233 = smul.u32 17, %s21
      %p234 = scmp.lt.s32.totalorder %s20, 1
      %s235 = scalar_select %p234, %s20, 1
      %p236 = scmp.lt.s32.totalorder %s233, 16
      %s237 = scalar_select %p236, %s233, 16
      %s238 = smul.addr %s235, 51
      %s239 = sadd.s32 %s237, %s238
      %s240 = smul.addr %s239, 8
      %s241 = scalar_lea.vmem %s1, %s240
      %p242 = pneg %p79
      %p243 = pneg %p76
      %s244 = smul.u32 17, %s21
      %p245 = scmp.lt.s32.totalorder %s244, 16
      %s246 = scalar_select %p245, %s244, 16
      %s247 = smul.addr %s246, 8
      %s248 = scalar_lea.vmem %s2, %s247
      %p249 = pneg %p105
      %p250 = pneg %p102
      %p251 = pneg %p133
      %p252 = pneg %p130
      %s253 = smul.u32 17, %s21
      %p254 = scmp.lt.s32.totalorder %s20, 1
      %s255 = scalar_select %p254, %s20, 1
      %p256 = scmp.lt.s32.totalorder %s253, 16
      %s257 = scalar_select %p256, %s253, 16
      %s258 = smul.addr %s255, 17
      %s259 = sadd.s32 %s257, %s258
      %s260 = smul.addr %s259, 8
      %s261 = scalar_lea.vmem %s3, %s260
      %p262 = pneg %p161
      %p263 = pneg %p158
      %s264 = smul.u32 17, %s21
      %p265 = scmp.lt.s32.totalorder %s20, 1
      %s266 = scalar_select %p265, %s20, 1
      %p267 = scmp.lt.s32.totalorder %s264, 16
      %s268 = scalar_select %p267, %s264, 16
      %s269 = smul.addr %s266, 17
      %s270 = sadd.s32 %s268, %s269
      %s271 = smul.addr %s270, 8
      %s272 = scalar_lea.vmem %s4, %s271
      %s273 = smul.u32 17, %s21
      %p274 = scmp.lt.s32.totalorder %s20, 1
      %s275 = scalar_select %p274, %s20, 1
      %p276 = scmp.lt.s32.totalorder %s273, 16
      %s277 = scalar_select %p276, %s273, 16
      %s278 = smul.addr %s275, 51
      %s279 = sadd.s32 %s277, %s278
      %s280 = smul.addr %s279, 8
      %s281 = scalar_lea.vmem %s0, %s280
      %s282 = smul.u32 17, %s21
      %s283 = smul.u32 17, %s21
      %p284 = scmp.lt.s32.totalorder %s20, 1
      %s285 = scalar_select %p284, %s20, 1
      %p286 = scmp.lt.s32.totalorder %s283, 16
      %s287 = scalar_select %p286, %s283, 16
      %s288 = smul.addr %s285, 51
      %s289 = sadd.s32 %s287, %s288
      %s290 = smul.addr %s289, 8
      %s291 = scalar_lea.vmem %s1, %s290
      %s292 = smul.u32 17, %s21
      %s293 = smul.u32 17, %s21
      %p294 = scmp.lt.s32.totalorder %s293, 16
      %s295 = scalar_select %p294, %s293, 16
      %s296 = smul.addr %s295, 8
      %s297 = scalar_lea.vmem %s2, %s296
      %s298 = smul.u32 17, %s21
      %s299 = smul.u32 17, %s21
      %p300 = scmp.lt.s32.totalorder %s20, 1
      %s301 = scalar_select %p300, %s20, 1
      %p302 = scmp.lt.s32.totalorder %s299, 16
      %s303 = scalar_select %p302, %s299, 16
      %s304 = smul.addr %s301, 17
      %s305 = sadd.s32 %s303, %s304
      %s306 = smul.addr %s305, 8
      %s307 = scalar_lea.vmem %s3, %s306
      %s308 = smul.u32 17, %s21
      %s309 = smul.u32 17, %s21
      %p310 = scmp.lt.s32.totalorder %s20, 1
      %s311 = scalar_select %p310, %s20, 1
      %p312 = scmp.lt.s32.totalorder %s309, 16
      %s313 = scalar_select %p312, %s309, 16
      %s314 = smul.addr %s311, 17
      %s315 = sadd.s32 %s313, %s314
      %s316 = smul.addr %s315, 8
      %s317 = scalar_lea.vmem %s4, %s316
      %s318 = smul.u32 17, %s21
      %v319 = vld [vmem:[%s297] sm:$0xff]
      %v320 = vld [vmem:[%s297 + $0x8] sm:$0xff]
      %v321 = vld [vmem:[%s297 + $0x10] sm:$0xff]
      %v322 = vld [vmem:[%s297 + $0x18] sm:$0xff]
      %v323 = vld [vmem:[%s297 + $0x20] sm:$0xff]
      %v324 = vld [vmem:[%s297 + $0x28] sm:$0xff]
      %v325 = vld [vmem:[%s297 + $0x30] sm:$0xff]
      %v326 = vld [vmem:[%s297 + $0x38] sm:$0xff]
      %v327 = vld [vmem:[%s297 + $0x40] sm:$0xff]
      %v328 = vld [vmem:[%s297 + $0x48] sm:$0xff]
      %v329 = vld [vmem:[%s297 + $0x50] sm:$0xff]
      %v330 = vld [vmem:[%s297 + $0x58] sm:$0xff]
      %v331 = vld [vmem:[%s297 + $0x60] sm:$0xff]
      %v332 = vld [vmem:[%s297 + $0x68] sm:$0xff]
      %v333 = vld [vmem:[%s297 + $0x70] sm:$0xff]
      %v334 = vld [vmem:[%s297 + $0x78] sm:$0xff]
      %v335 = vld [vmem:[%s297 + $0x80] sm:$0xff]
      %s336 = scalar_lea.vmem %s297, 136
      %v337 = vld [vmem:[%s336] sm:$0xff]
      %v338 = vld [vmem:[%s336 + $0x8] sm:$0xff]
      %v339 = vld [vmem:[%s336 + $0x10] sm:$0xff]
      %v340 = vld [vmem:[%s336 + $0x18] sm:$0xff]
      %v341 = vld [vmem:[%s336 + $0x20] sm:$0xff]
      %v342 = vld [vmem:[%s336 + $0x28] sm:$0xff]
      %v343 = vld [vmem:[%s336 + $0x30] sm:$0xff]
      %v344 = vld [vmem:[%s336 + $0x38] sm:$0xff]
      %v345 = vld [vmem:[%s336 + $0x40] sm:$0xff]
      %v346 = vld [vmem:[%s336 + $0x48] sm:$0xff]
      %v347 = vld [vmem:[%s336 + $0x50] sm:$0xff]
      %v348 = vld [vmem:[%s336 + $0x58] sm:$0xff]
      %v349 = vld [vmem:[%s336 + $0x60] sm:$0xff]
      %v350 = vld [vmem:[%s336 + $0x68] sm:$0xff]
      %v351 = vld [vmem:[%s336 + $0x70] sm:$0xff]
      %v352 = vld [vmem:[%s336 + $0x78] sm:$0xff]
      %v353 = vld [vmem:[%s336 + $0x80] sm:$0xff]
      %s354 = scalar_lea.vmem %s297, 272
      %v355 = vld [vmem:[%s354] sm:$0xff]
      %v356 = vld [vmem:[%s354 + $0x8] sm:$0xff]
      %v357 = vld [vmem:[%s354 + $0x10] sm:$0xff]
      %v358 = vld [vmem:[%s354 + $0x18] sm:$0xff]
      %v359 = vld [vmem:[%s354 + $0x20] sm:$0xff]
      %v360 = vld [vmem:[%s354 + $0x28] sm:$0xff]
      %v361 = vld [vmem:[%s354 + $0x30] sm:$0xff]
      %v362 = vld [vmem:[%s354 + $0x38] sm:$0xff]
      %v363 = vld [vmem:[%s354 + $0x40] sm:$0xff]
      %v364 = vld [vmem:[%s354 + $0x48] sm:$0xff]
      %v365 = vld [vmem:[%s354 + $0x50] sm:$0xff]
      %v366 = vld [vmem:[%s354 + $0x58] sm:$0xff]
      %v367 = vld [vmem:[%s354 + $0x60] sm:$0xff]
      %v368 = vld [vmem:[%s354 + $0x68] sm:$0xff]
      %v369 = vld [vmem:[%s354 + $0x70] sm:$0xff]
      %v370 = vld [vmem:[%s354 + $0x78] sm:$0xff]
      %v371 = vld [vmem:[%s354 + $0x80] sm:$0xff]
      %v372 = vld [vmem:[%s291] sm:$0xff]
      %v373 = vld [vmem:[%s291 + $0x8] sm:$0xff]
      %v374 = vld [vmem:[%s291 + $0x10] sm:$0xff]
      %v375 = vld [vmem:[%s291 + $0x18] sm:$0xff]
      %v376 = vld [vmem:[%s291 + $0x20] sm:$0xff]
      %v377 = vld [vmem:[%s291 + $0x28] sm:$0xff]
      %v378 = vld [vmem:[%s291 + $0x30] sm:$0xff]
      %v379 = vld [vmem:[%s291 + $0x38] sm:$0xff]
      %v380 = vld [vmem:[%s291 + $0x40] sm:$0xff]
      %v381 = vld [vmem:[%s291 + $0x48] sm:$0xff]
      %v382 = vld [vmem:[%s291 + $0x50] sm:$0xff]
      %v383 = vld [vmem:[%s291 + $0x58] sm:$0xff]
      %v384 = vld [vmem:[%s291 + $0x60] sm:$0xff]
      %v385 = vld [vmem:[%s291 + $0x68] sm:$0xff]
      %v386 = vld [vmem:[%s291 + $0x70] sm:$0xff]
      %v387 = vld [vmem:[%s291 + $0x78] sm:$0xff]
      %v388 = vld [vmem:[%s291 + $0x80] sm:$0xff]
      %v389 = vmul.f32 %v372, %v319
      %v390 = vmul.f32 %v373, %v320
      %v391 = vmul.f32 %v374, %v321
      %v392 = vmul.f32 %v375, %v322
      %v393 = vmul.f32 %v376, %v323
      %v394 = vmul.f32 %v377, %v324
      %v395 = vmul.f32 %v378, %v325
      %v396 = vmul.f32 %v379, %v326
      %v397 = vmul.f32 %v380, %v327
      %v398 = vmul.f32 %v381, %v328
      %v399 = vmul.f32 %v382, %v329
      %v400 = vmul.f32 %v383, %v330
      %v401 = vmul.f32 %v384, %v331
      %v402 = vmul.f32 %v385, %v332
      %v403 = vmul.f32 %v386, %v333
      %v404 = vmul.f32 %v387, %v334
      %v405 = vmul.f32 %v388, %v335
      %s406 = scalar_lea.vmem %s291, 136
      %v407 = vld [vmem:[%s406] sm:$0xff]
      %v408 = vld [vmem:[%s406 + $0x8] sm:$0xff]
      %v409 = vld [vmem:[%s406 + $0x10] sm:$0xff]
      %v410 = vld [vmem:[%s406 + $0x18] sm:$0xff]
      %v411 = vld [vmem:[%s406 + $0x20] sm:$0xff]
      %v412 = vld [vmem:[%s406 + $0x28] sm:$0xff]
      %v413 = vld [vmem:[%s406 + $0x30] sm:$0xff]
      %v414 = vld [vmem:[%s406 + $0x38] sm:$0xff]
      %v415 = vld [vmem:[%s406 + $0x40] sm:$0xff]
      %v416 = vld [vmem:[%s406 + $0x48] sm:$0xff]
      %v417 = vld [vmem:[%s406 + $0x50] sm:$0xff]
      %v418 = vld [vmem:[%s406 + $0x58] sm:$0xff]
      %v419 = vld [vmem:[%s406 + $0x60] sm:$0xff]
      %v420 = vld [vmem:[%s406 + $0x68] sm:$0xff]
      %v421 = vld [vmem:[%s406 + $0x70] sm:$0xff]
      %v422 = vld [vmem:[%s406 + $0x78] sm:$0xff]
      %v423 = vld [vmem:[%s406 + $0x80] sm:$0xff]
      %v424 = vmul.f32 %v407, %v337
      %v425 = vmul.f32 %v408, %v338
      %v426 = vmul.f32 %v409, %v339
      %v427 = vmul.f32 %v410, %v340
      %v428 = vmul.f32 %v411, %v341
      %v429 = vmul.f32 %v412, %v342
      %v430 = vmul.f32 %v413, %v343
      %v431 = vmul.f32 %v414, %v344
      %v432 = vmul.f32 %v415, %v345
      %v433 = vmul.f32 %v416, %v346
      %v434 = vmul.f32 %v417, %v347
      %v435 = vmul.f32 %v418, %v348
      %v436 = vmul.f32 %v419, %v349
      %v437 = vmul.f32 %v420, %v350
      %v438 = vmul.f32 %v421, %v351
      %v439 = vmul.f32 %v422, %v352
      %v440 = vmul.f32 %v423, %v353
      %v441 = vadd.f32 %v389, %v424
      %v442 = vadd.f32 %v390, %v425
      %v443 = vadd.f32 %v391, %v426
      %v444 = vadd.f32 %v392, %v427
      %v445 = vadd.f32 %v393, %v428
      %v446 = vadd.f32 %v394, %v429
      %v447 = vadd.f32 %v395, %v430
      %v448 = vadd.f32 %v396, %v431
      %v449 = vadd.f32 %v397, %v432
      %v450 = vadd.f32 %v398, %v433
      %v451 = vadd.f32 %v399, %v434
      %v452 = vadd.f32 %v400, %v435
      %v453 = vadd.f32 %v401, %v436
      %v454 = vadd.f32 %v402, %v437
      %v455 = vadd.f32 %v403, %v438
      %v456 = vadd.f32 %v404, %v439
      %v457 = vadd.f32 %v405, %v440
      %s458 = scalar_lea.vmem %s291, 272
      %v459 = vld [vmem:[%s458] sm:$0xff]
      %v460 = vld [vmem:[%s458 + $0x8] sm:$0xff]
      %v461 = vld [vmem:[%s458 + $0x10] sm:$0xff]
      %v462 = vld [vmem:[%s458 + $0x18] sm:$0xff]
      %v463 = vld [vmem:[%s458 + $0x20] sm:$0xff]
      %v464 = vld [vmem:[%s458 + $0x28] sm:$0xff]
      %v465 = vld [vmem:[%s458 + $0x30] sm:$0xff]
      %v466 = vld [vmem:[%s458 + $0x38] sm:$0xff]
      %v467 = vld [vmem:[%s458 + $0x40] sm:$0xff]
      %v468 = vld [vmem:[%s458 + $0x48] sm:$0xff]
      %v469 = vld [vmem:[%s458 + $0x50] sm:$0xff]
      %v470 = vld [vmem:[%s458 + $0x58] sm:$0xff]
      %v471 = vld [vmem:[%s458 + $0x60] sm:$0xff]
      %v472 = vld [vmem:[%s458 + $0x68] sm:$0xff]
      %v473 = vld [vmem:[%s458 + $0x70] sm:$0xff]
      %v474 = vld [vmem:[%s458 + $0x78] sm:$0xff]
      %v475 = vld [vmem:[%s458 + $0x80] sm:$0xff]
      %v476 = vmul.f32 %v459, %v355
      %v477 = vmul.f32 %v460, %v356
      %v478 = vmul.f32 %v461, %v357
      %v479 = vmul.f32 %v462, %v358
      %v480 = vmul.f32 %v463, %v359
      %v481 = vmul.f32 %v464, %v360
      %v482 = vmul.f32 %v465, %v361
      %v483 = vmul.f32 %v466, %v362
      %v484 = vmul.f32 %v467, %v363
      %v485 = vmul.f32 %v468, %v364
      %v486 = vmul.f32 %v469, %v365
      %v487 = vmul.f32 %v470, %v366
      %v488 = vmul.f32 %v471, %v367
      %v489 = vmul.f32 %v472, %v368
      %v490 = vmul.f32 %v473, %v369
      %v491 = vmul.f32 %v474, %v370
      %v492 = vmul.f32 %v475, %v371
      %v493 = vadd.f32 %v441, %v476
      %v494 = vadd.f32 %v442, %v477
      %v495 = vadd.f32 %v443, %v478
      %v496 = vadd.f32 %v444, %v479
      %v497 = vadd.f32 %v445, %v480
      %v498 = vadd.f32 %v446, %v481
      %v499 = vadd.f32 %v447, %v482
      %v500 = vadd.f32 %v448, %v483
      %v501 = vadd.f32 %v449, %v484
      %v502 = vadd.f32 %v450, %v485
      %v503 = vadd.f32 %v451, %v486
      %v504 = vadd.f32 %v452, %v487
      %v505 = vadd.f32 %v453, %v488
      %v506 = vadd.f32 %v454, %v489
      %v507 = vadd.f32 %v455, %v490
      %v508 = vadd.f32 %v456, %v491
      %v509 = vadd.f32 %v457, %v492
      %510 = vst [vmem:[%s307] sm:$0xff] %v493
      %511 = vst [vmem:[%s307 + $0x8] sm:$0xff] %v494
      %512 = vst [vmem:[%s307 + $0x10] sm:$0xff] %v495
      %513 = vst [vmem:[%s307 + $0x18] sm:$0xff] %v496
      %514 = vst [vmem:[%s307 + $0x20] sm:$0xff] %v497
      %515 = vst [vmem:[%s307 + $0x28] sm:$0xff] %v498
      %516 = vst [vmem:[%s307 + $0x30] sm:$0xff] %v499
      %517 = vst [vmem:[%s307 + $0x38] sm:$0xff] %v500
      %518 = vst [vmem:[%s307 + $0x40] sm:$0xff] %v501
      %519 = vst [vmem:[%s307 + $0x48] sm:$0xff] %v502
      %520 = vst [vmem:[%s307 + $0x50] sm:$0xff] %v503
      %521 = vst [vmem:[%s307 + $0x58] sm:$0xff] %v504
      %522 = vst [vmem:[%s307 + $0x60] sm:$0xff] %v505
      %523 = vst [vmem:[%s307 + $0x68] sm:$0xff] %v506
      %524 = vst [vmem:[%s307 + $0x70] sm:$0xff] %v507
      %525 = vst [vmem:[%s307 + $0x78] sm:$0xff] %v508
      %526 = vst [vmem:[%s307 + $0x80] sm:$0xff] %v509
      %v527 = vld [vmem:[%s281] sm:$0xff]
      %v528 = vld [vmem:[%s281 + $0x8] sm:$0xff]
      %v529 = vld [vmem:[%s281 + $0x10] sm:$0xff]
      %v530 = vld [vmem:[%s281 + $0x18] sm:$0xff]
      %v531 = vld [vmem:[%s281 + $0x20] sm:$0xff]
      %v532 = vld [vmem:[%s281 + $0x28] sm:$0xff]
      %v533 = vld [vmem:[%s281 + $0x30] sm:$0xff]
      %v534 = vld [vmem:[%s281 + $0x38] sm:$0xff]
      %v535 = vld [vmem:[%s281 + $0x40] sm:$0xff]
      %v536 = vld [vmem:[%s281 + $0x48] sm:$0xff]
      %v537 = vld [vmem:[%s281 + $0x50] sm:$0xff]
      %v538 = vld [vmem:[%s281 + $0x58] sm:$0xff]
      %v539 = vld [vmem:[%s281 + $0x60] sm:$0xff]
      %v540 = vld [vmem:[%s281 + $0x68] sm:$0xff]
      %v541 = vld [vmem:[%s281 + $0x70] sm:$0xff]
      %v542 = vld [vmem:[%s281 + $0x78] sm:$0xff]
      %v543 = vld [vmem:[%s281 + $0x80] sm:$0xff]
      %v544 = vmul.f32 %v527, %v319
      %v545 = vmul.f32 %v528, %v320
      %v546 = vmul.f32 %v529, %v321
      %v547 = vmul.f32 %v530, %v322
      %v548 = vmul.f32 %v531, %v323
      %v549 = vmul.f32 %v532, %v324
      %v550 = vmul.f32 %v533, %v325
      %v551 = vmul.f32 %v534, %v326
      %v552 = vmul.f32 %v535, %v327
      %v553 = vmul.f32 %v536, %v328
      %v554 = vmul.f32 %v537, %v329
      %v555 = vmul.f32 %v538, %v330
      %v556 = vmul.f32 %v539, %v331
      %v557 = vmul.f32 %v540, %v332
      %v558 = vmul.f32 %v541, %v333
      %v559 = vmul.f32 %v542, %v334
      %v560 = vmul.f32 %v543, %v335
      %s561 = scalar_lea.vmem %s281, 136
      %v562 = vld [vmem:[%s561] sm:$0xff]
      %v563 = vld [vmem:[%s561 + $0x8] sm:$0xff]
      %v564 = vld [vmem:[%s561 + $0x10] sm:$0xff]
      %v565 = vld [vmem:[%s561 + $0x18] sm:$0xff]
      %v566 = vld [vmem:[%s561 + $0x20] sm:$0xff]
      %v567 = vld [vmem:[%s561 + $0x28] sm:$0xff]
      %v568 = vld [vmem:[%s561 + $0x30] sm:$0xff]
      %v569 = vld [vmem:[%s561 + $0x38] sm:$0xff]
      %v570 = vld [vmem:[%s561 + $0x40] sm:$0xff]
      %v571 = vld [vmem:[%s561 + $0x48] sm:$0xff]
      %v572 = vld [vmem:[%s561 + $0x50] sm:$0xff]
      %v573 = vld [vmem:[%s561 + $0x58] sm:$0xff]
      %v574 = vld [vmem:[%s561 + $0x60] sm:$0xff]
      %v575 = vld [vmem:[%s561 + $0x68] sm:$0xff]
      %v576 = vld [vmem:[%s561 + $0x70] sm:$0xff]
      %v577 = vld [vmem:[%s561 + $0x78] sm:$0xff]
      %v578 = vld [vmem:[%s561 + $0x80] sm:$0xff]
      %v579 = vmul.f32 %v562, %v337
      %v580 = vmul.f32 %v563, %v338
      %v581 = vmul.f32 %v564, %v339
      %v582 = vmul.f32 %v565, %v340
      %v583 = vmul.f32 %v566, %v341
      %v584 = vmul.f32 %v567, %v342
      %v585 = vmul.f32 %v568, %v343
      %v586 = vmul.f32 %v569, %v344
      %v587 = vmul.f32 %v570, %v345
      %v588 = vmul.f32 %v571, %v346
      %v589 = vmul.f32 %v572, %v347
      %v590 = vmul.f32 %v573, %v348
      %v591 = vmul.f32 %v574, %v349
      %v592 = vmul.f32 %v575, %v350
      %v593 = vmul.f32 %v576, %v351
      %v594 = vmul.f32 %v577, %v352
      %v595 = vmul.f32 %v578, %v353
      %v596 = vadd.f32 %v544, %v579
      %v597 = vadd.f32 %v545, %v580
      %v598 = vadd.f32 %v546, %v581
      %v599 = vadd.f32 %v547, %v582
      %v600 = vadd.f32 %v548, %v583
      %v601 = vadd.f32 %v549, %v584
      %v602 = vadd.f32 %v550, %v585
      %v603 = vadd.f32 %v551, %v586
      %v604 = vadd.f32 %v552, %v587
      %v605 = vadd.f32 %v553, %v588
      %v606 = vadd.f32 %v554, %v589
      %v607 = vadd.f32 %v555, %v590
      %v608 = vadd.f32 %v556, %v591
      %v609 = vadd.f32 %v557, %v592
      %v610 = vadd.f32 %v558, %v593
      %v611 = vadd.f32 %v559, %v594
      %v612 = vadd.f32 %v560, %v595
      %s613 = scalar_lea.vmem %s281, 272
      %v614 = vld [vmem:[%s613] sm:$0xff]
      %v615 = vld [vmem:[%s613 + $0x8] sm:$0xff]
      %v616 = vld [vmem:[%s613 + $0x10] sm:$0xff]
      %v617 = vld [vmem:[%s613 + $0x18] sm:$0xff]
      %v618 = vld [vmem:[%s613 + $0x20] sm:$0xff]
      %v619 = vld [vmem:[%s613 + $0x28] sm:$0xff]
      %v620 = vld [vmem:[%s613 + $0x30] sm:$0xff]
      %v621 = vld [vmem:[%s613 + $0x38] sm:$0xff]
      %v622 = vld [vmem:[%s613 + $0x40] sm:$0xff]
      %v623 = vld [vmem:[%s613 + $0x48] sm:$0xff]
      %v624 = vld [vmem:[%s613 + $0x50] sm:$0xff]
      %v625 = vld [vmem:[%s613 + $0x58] sm:$0xff]
      %v626 = vld [vmem:[%s613 + $0x60] sm:$0xff]
      %v627 = vld [vmem:[%s613 + $0x68] sm:$0xff]
      %v628 = vld [vmem:[%s613 + $0x70] sm:$0xff]
      %v629 = vld [vmem:[%s613 + $0x78] sm:$0xff]
      %v630 = vld [vmem:[%s613 + $0x80] sm:$0xff]
      %v631 = vmul.f32 %v614, %v355
      %v632 = vmul.f32 %v615, %v356
      %v633 = vmul.f32 %v616, %v357
      %v634 = vmul.f32 %v617, %v358
      %v635 = vmul.f32 %v618, %v359
      %v636 = vmul.f32 %v619, %v360
      %v637 = vmul.f32 %v620, %v361
      %v638 = vmul.f32 %v621, %v362
      %v639 = vmul.f32 %v622, %v363
      %v640 = vmul.f32 %v623, %v364
      %v641 = vmul.f32 %v624, %v365
      %v642 = vmul.f32 %v625, %v366
      %v643 = vmul.f32 %v626, %v367
      %v644 = vmul.f32 %v627, %v368
      %v645 = vmul.f32 %v628, %v369
      %v646 = vmul.f32 %v629, %v370
      %v647 = vmul.f32 %v630, %v371
      %v648 = vadd.f32 %v596, %v631
      %v649 = vadd.f32 %v597, %v632
      %v650 = vadd.f32 %v598, %v633
      %v651 = vadd.f32 %v599, %v634
      %v652 = vadd.f32 %v600, %v635
      %v653 = vadd.f32 %v601, %v636
      %v654 = vadd.f32 %v602, %v637
      %v655 = vadd.f32 %v603, %v638
      %v656 = vadd.f32 %v604, %v639
      %v657 = vadd.f32 %v605, %v640
      %v658 = vadd.f32 %v606, %v641
      %v659 = vadd.f32 %v607, %v642
      %v660 = vadd.f32 %v608, %v643
      %v661 = vadd.f32 %v609, %v644
      %v662 = vadd.f32 %v610, %v645
      %v663 = vadd.f32 %v611, %v646
      %v664 = vadd.f32 %v612, %v647
      %v665 = vsub.f32 0.0, %v648
      %v666 = vsub.f32 0.0, %v649
      %v667 = vsub.f32 0.0, %v650
      %v668 = vsub.f32 0.0, %v651
      %v669 = vsub.f32 0.0, %v652
      %v670 = vsub.f32 0.0, %v653
      %v671 = vsub.f32 0.0, %v654
      %v672 = vsub.f32 0.0, %v655
      %v673 = vsub.f32 0.0, %v656
      %v674 = vsub.f32 0.0, %v657
      %v675 = vsub.f32 0.0, %v658
      %v676 = vsub.f32 0.0, %v659
      %v677 = vsub.f32 0.0, %v660
      %v678 = vsub.f32 0.0, %v661
      %v679 = vsub.f32 0.0, %v662
      %v680 = vsub.f32 0.0, %v663
      %v681 = vsub.f32 0.0, %v664
      %682 = vst [vmem:[%s317] sm:$0xff] %v665
      %683 = vst [vmem:[%s317 + $0x8] sm:$0xff] %v666
      %684 = vst [vmem:[%s317 + $0x10] sm:$0xff] %v667
      %685 = vst [vmem:[%s317 + $0x18] sm:$0xff] %v668
      %686 = vst [vmem:[%s317 + $0x20] sm:$0xff] %v669
      %687 = vst [vmem:[%s317 + $0x28] sm:$0xff] %v670
      %688 = vst [vmem:[%s317 + $0x30] sm:$0xff] %v671
      %689 = vst [vmem:[%s317 + $0x38] sm:$0xff] %v672
      %690 = vst [vmem:[%s317 + $0x40] sm:$0xff] %v673
      %691 = vst [vmem:[%s317 + $0x48] sm:$0xff] %v674
      %692 = vst [vmem:[%s317 + $0x50] sm:$0xff] %v675
      %693 = vst [vmem:[%s317 + $0x58] sm:$0xff] %v676
      %694 = vst [vmem:[%s317 + $0x60] sm:$0xff] %v677
      %695 = vst [vmem:[%s317 + $0x68] sm:$0xff] %v678
      %696 = vst [vmem:[%s317 + $0x70] sm:$0xff] %v679
      %697 = vst [vmem:[%s317 + $0x78] sm:$0xff] %v680
      %698 = vst [vmem:[%s317 + $0x80] sm:$0xff] %v681
      %s699 = smul.u32 17, %s21
      %p700 = scmp.lt.s32.totalorder %s20, 1
      %s701 = scalar_select %p700, %s20, 1
      %p702 = scmp.lt.s32.totalorder %s699, 16
      %s703 = scalar_select %p702, %s699, 16
      %s704 = smul.addr %s701, 17
      %s705 = sadd.s32 %s703, %s704
      %s706 = smul.addr %s705, 8
      %s707 = scalar_lea.vmem %s3, %s706
      %s708 = smul.u32 17, %s21
      %p709 = scmp.lt.s32.totalorder %s20, 1
      %s710 = scalar_select %p709, %s20, 1
      %p711 = scmp.lt.s32.totalorder %s708, 16
      %s712 = scalar_select %p711, %s708, 16
      %s713 = smul.addr %s710, 17
      %s714 = sadd.s32 %s712, %s713
      %s715 = smul.addr %s714, 8
      %s716 = scalar_lea.vmem %s4, %s715
      // Predicated region
      $region33: #{run.1} parent=31 // pred_check
        %p717 = pneg %p130
      $region34: #{run.1} parent=31 // pred_check_branch
        %719 = sbr.rel (%p717) target = $region36
      $region35: #{run.1} parent=31 // pred_region
        %s720 = smul.u32 17, %s21
      $region36: #{run.1} parent=31 // pred_fallthru
        _
      // Predicated region
      $region37: #{run.1} parent=31 // pred_check
        %p721 = pneg %p158
      $region38: #{run.1} parent=31 // pred_check_branch
        %723 = sbr.rel (%p721) target = $region40
      $region39: #{run.1} parent=31 // pred_region
        %s724 = smul.u32 17, %s21
      $region40: #{run.1} parent=31 // pred_fallthru
        _
    $region32: #{run.1} parent=5 // pred_fallthru
      _
    %p725 = scmp.le.s32.totalorder 2, %s11
    // Predicated region
    $region41: #{run.1} parent=5 // pred_check
      %p726 = pneg %p725
    $region42: #{run.1} parent=5 // pred_check_branch
      %728 = sbr.rel (%p726) target = $region44
    $region43: #{run.1} parent=5 // pred_region
      %s729 = ssub.s32 %s11, 2
      // Predicated region
      $region45: #{run.1} parent=43 // pred_check
        %p730 = pneg %p136
      $region46: #{run.1} parent=43 // pred_check_branch
        %732 = sbr.rel (%p730) target = $region48
      $region47: #{run.1} parent=43 // pred_region
        %s733 = smul.u32 17, %s23
        %p734 = scmp.lt.s32.totalorder %s22, 1
        %s735 = scalar_select %p734, %s22, 1
        %p736 = scmp.lt.s32.totalorder %s733, 16
        %s737 = scalar_select %p736, %s733, 16
        %s738 = smul.addr %s735, 17
        %s739 = sadd.s32 %s737, %s738
        %s740 = smul.addr %s739, 8
        %s741 = scalar_lea.vmem %s3, %s740
      $region48: #{run.1} parent=43 // pred_fallthru
        _
      // Predicated region
      $region49: #{run.1} parent=43 // pred_check
        %p742 = pneg %p164
      $region50: #{run.1} parent=43 // pred_check_branch
        %744 = sbr.rel (%p742) target = $region52
      $region51: #{run.1} parent=43 // pred_region
        %s745 = smul.u32 17, %s23
        %p746 = scmp.lt.s32.totalorder %s22, 1
        %s747 = scalar_select %p746, %s22, 1
        %p748 = scmp.lt.s32.totalorder %s745, 16
        %s749 = scalar_select %p748, %s745, 16
        %s750 = smul.addr %s747, 17
        %s751 = sadd.s32 %s749, %s750
        %s752 = smul.addr %s751, 8
        %s753 = scalar_lea.vmem %s4, %s752
      $region52: #{run.1} parent=43 // pred_fallthru
        _
    $region44: #{run.1} parent=5 // pred_fallthru
      _
  $region6: #{run.1} parent=0 // loop_footer
    %s15 = sadd.s32 1, %s11
  $region7: #{run.1} parent=0 // loop_footer_branch
    %10 = sbr.rel target = $region3
  $region8: #{run.1} parent=0 // loop_exit
    _

// kernel: reverse.1
$region0: #{reverse.1}
  #allocation0 [shape = 's32[1]{0}', space=sflag, size = 0x4, scoped, tag = 'scoped memory for reverse.1']
  %s0 = inlined_call_operand.vmem [shape: f32[2,32,32,15], index: 0, kind: input, shape index: {}]
  %s1 = inlined_call_operand.vmem [shape: f32[2,32,32,15], index: 1, kind: output, shape index: {}]
  %s2 = scalar_lea.vmem %s0, 448
  %v3 = vld [vmem:[%s2] sm:$0xff]
  %4 = vst [vmem:[%s1] sm:$0xff] %v3
  %s5 = scalar_lea.vmem %s0, 928
  %v6 = vld [vmem:[%s5] sm:$0xff]
  %s7 = scalar_lea.vmem %s1, 480
  %8 = vst [vmem:[%s7] sm:$0xff] %v6
  %s9 = scalar_lea.vmem %s0, 416
  %v10 = vld [vmem:[%s9] sm:$0xff]
  %s11 = scalar_lea.vmem %s1, 32
  %12 = vst [vmem:[%s11] sm:$0xff] %v10
  %s13 = scalar_lea.vmem %s0, 896
  %v14 = vld [vmem:[%s13] sm:$0xff]
  %s15 = scalar_lea.vmem %s1, 512
  %16 = vst [vmem:[%s15] sm:$0xff] %v14
  %s17 = scalar_lea.vmem %s0, 384
  %v18 = vld [vmem:[%s17] sm:$0xff]
  %s19 = scalar_lea.vmem %s1, 64
  %20 = vst [vmem:[%s19] sm:$0xff] %v18
  %s21 = scalar_lea.vmem %s0, 864
  %v22 = vld [vmem:[%s21] sm:$0xff]
  %s23 = scalar_lea.vmem %s1, 544
  %24 = vst [vmem:[%s23] sm:$0xff] %v22
  %s25 = scalar_lea.vmem %s0, 352
  %v26 = vld [vmem:[%s25] sm:$0xff]
  %s27 = scalar_lea.vmem %s1, 96
  %28 = vst [vmem:[%s27] sm:$0xff] %v26
  %s29 = scalar_lea.vmem %s0, 832
  %v30 = vld [vmem:[%s29] sm:$0xff]
  %s31 = scalar_lea.vmem %s1, 576
  %32 = vst [vmem:[%s31] sm:$0xff] %v30
  %s33 = scalar_lea.vmem %s0, 320
  %v34 = vld [vmem:[%s33] sm:$0xff]
  %s35 = scalar_lea.vmem %s1, 128
  %36 = vst [vmem:[%s35] sm:$0xff] %v34
  %s37 = scalar_lea.vmem %s0, 800
  %v38 = vld [vmem:[%s37] sm:$0xff]
  %s39 = scalar_lea.vmem %s1, 608
  %40 = vst [vmem:[%s39] sm:$0xff] %v38
  %s41 = scalar_lea.vmem %s0, 288
  %v42 = vld [vmem:[%s41] sm:$0xff]
  %s43 = scalar_lea.vmem %s1, 160
  %44 = vst [vmem:[%s43] sm:$0xff] %v42
  %s45 = scalar_lea.vmem %s0, 768
  %v46 = vld [vmem:[%s45] sm:$0xff]
  %s47 = scalar_lea.vmem %s1, 640
  %48 = vst [vmem:[%s47] sm:$0xff] %v46
  %s49 = scalar_lea.vmem %s0, 256
  %v50 = vld [vmem:[%s49] sm:$0xff]
  %s51 = scalar_lea.vmem %s1, 192
  %52 = vst [vmem:[%s51] sm:$0xff] %v50
  %s53 = scalar_lea.vmem %s0, 736
  %v54 = vld [vmem:[%s53] sm:$0xff]
  %s55 = scalar_lea.vmem %s1, 672
  %56 = vst [vmem:[%s55] sm:$0xff] %v54
  %s57 = scalar_lea.vmem %s0, 224
  %v58 = vld [vmem:[%s57] sm:$0xff]
  %s59 = scalar_lea.vmem %s1, 224
  %60 = vst [vmem:[%s59] sm:$0xff] %v58
  %s61 = scalar_lea.vmem %s0, 704
  %v62 = vld [vmem:[%s61] sm:$0xff]
  %s63 = scalar_lea.vmem %s1, 704
  %64 = vst [vmem:[%s63] sm:$0xff] %v62
  %s65 = scalar_lea.vmem %s0, 192
  %v66 = vld [vmem:[%s65] sm:$0xff]
  %s67 = scalar_lea.vmem %s1, 256
  %68 = vst [vmem:[%s67] sm:$0xff] %v66
  %s69 = scalar_lea.vmem %s0, 672
  %v70 = vld [vmem:[%s69] sm:$0xff]
  %s71 = scalar_lea.vmem %s1, 736
  %72 = vst [vmem:[%s71] sm:$0xff] %v70
  %s73 = scalar_lea.vmem %s0, 160
  %v74 = vld [vmem:[%s73] sm:$0xff]
  %s75 = scalar_lea.vmem %s1, 288
  %76 = vst [vmem:[%s75] sm:$0xff] %v74
  %s77 = scalar_lea.vmem %s0, 640
  %v78 = vld [vmem:[%s77] sm:$0xff]
  %s79 = scalar_lea.vmem %s1, 768
  %80 = vst [vmem:[%s79] sm:$0xff] %v78
  %s81 = scalar_lea.vmem %s0, 128
  %v82 = vld [vmem:[%s81] sm:$0xff]
  %s83 = scalar_lea.vmem %s1, 320
  %84 = vst [vmem:[%s83] sm:$0xff] %v82
  %s85 = scalar_lea.vmem %s0, 608
  %v86 = vld [vmem:[%s85] sm:$0xff]
  %s87 = scalar_lea.vmem %s1, 800
  %88 = vst [vmem:[%s87] sm:$0xff] %v86
  %s89 = scalar_lea.vmem %s0, 96
  %v90 = vld [vmem:[%s89] sm:$0xff]
  %s91 = scalar_lea.vmem %s1, 352
  %92 = vst [vmem:[%s91] sm:$0xff] %v90
  %s93 = scalar_lea.vmem %s0, 576
  %v94 = vld [vmem:[%s93] sm:$0xff]
  %s95 = scalar_lea.vmem %s1, 832
  %96 = vst [vmem:[%s95] sm:$0xff] %v94
  %s97 = scalar_lea.vmem %s0, 64
  %v98 = vld [vmem:[%s97] sm:$0xff]
  %s99 = scalar_lea.vmem %s1, 384
  %100 = vst [vmem:[%s99] sm:$0xff] %v98
  %s101 = scalar_lea.vmem %s0, 544
  %v102 = vld [vmem:[%s101] sm:$0xff]
  %s103 = scalar_lea.vmem %s1, 864
  %104 = vst [vmem:[%s103] sm:$0xff] %v102
  %s105 = scalar_lea.vmem %s0, 32
  %v106 = vld [vmem:[%s105] sm:$0xff]
  %s107 = scalar_lea.vmem %s1, 416
  %108 = vst [vmem:[%s107] sm:$0xff] %v106
  %s109 = scalar_lea.vmem %s0, 512
  %v110 = vld [vmem:[%s109] sm:$0xff]
  %s111 = scalar_lea.vmem %s1, 896
  %112 = vst [vmem:[%s111] sm:$0xff] %v110
  %v113 = vld [vmem:[%s0] sm:$0xff]
  %s114 = scalar_lea.vmem %s1, 448
  %115 = vst [vmem:[%s114] sm:$0xff] %v113
  %s116 = scalar_lea.vmem %s0, 480
  %v117 = vld [vmem:[%s116] sm:$0xff]
  %s118 = scalar_lea.vmem %s1, 928
  %119 = vst [vmem:[%s118] sm:$0xff] %v117
  %s120 = scalar_lea.vmem %s0, 456
  %v121 = vld [vmem:[%s120] sm:$0xff]
  %s122 = scalar_lea.vmem %s1, 8
  %123 = vst [vmem:[%s122] sm:$0xff] %v121
  %s124 = scalar_lea.vmem %s0, 936
  %v125 = vld [vmem:[%s124] sm:$0xff]
  %s126 = scalar_lea.vmem %s1, 488
  %127 = vst [vmem:[%s126] sm:$0xff] %v125
  %s128 = scalar_lea.vmem %s0, 424
  %v129 = vld [vmem:[%s128] sm:$0xff]
  %s130 = scalar_lea.vmem %s1, 40
  %131 = vst [vmem:[%s130] sm:$0xff] %v129
  %s132 = scalar_lea.vmem %s0, 904
  %v133 = vld [vmem:[%s132] sm:$0xff]
  %s134 = scalar_lea.vmem %s1, 520
  %135 = vst [vmem:[%s134] sm:$0xff] %v133
  %s136 = scalar_lea.vmem %s0, 392
  %v137 = vld [vmem:[%s136] sm:$0xff]
  %s138 = scalar_lea.vmem %s1, 72
  %139 = vst [vmem:[%s138] sm:$0xff] %v137
  %s140 = scalar_lea.vmem %s0, 872
  %v141 = vld [vmem:[%s140] sm:$0xff]
  %s142 = scalar_lea.vmem %s1, 552
  %143 = vst [vmem:[%s142] sm:$0xff] %v141
  %s144 = scalar_lea.vmem %s0, 360
  %v145 = vld [vmem:[%s144] sm:$0xff]
  %s146 = scalar_lea.vmem %s1, 104
  %147 = vst [vmem:[%s146] sm:$0xff] %v145
  %s148 = scalar_lea.vmem %s0, 840
  %v149 = vld [vmem:[%s148] sm:$0xff]
  %s150 = scalar_lea.vmem %s1, 584
  %151 = vst [vmem:[%s150] sm:$0xff] %v149
  %s152 = scalar_lea.vmem %s0, 328
  %v153 = vld [vmem:[%s152] sm:$0xff]
  %s154 = scalar_lea.vmem %s1, 136
  %155 = vst [vmem:[%s154] sm:$0xff] %v153
  %s156 = scalar_lea.vmem %s0, 808
  %v157 = vld [vmem:[%s156] sm:$0xff]
  %s158 = scalar_lea.vmem %s1, 616
  %159 = vst [vmem:[%s158] sm:$0xff] %v157
  %s160 = scalar_lea.vmem %s0, 296
  %v161 = vld [vmem:[%s160] sm:$0xff]
  %s162 = scalar_lea.vmem %s1, 168
  %163 = vst [vmem:[%s162] sm:$0xff] %v161
  %s164 = scalar_lea.vmem %s0, 776
  %v165 = vld [vmem:[%s164] sm:$0xff]
  %s166 = scalar_lea.vmem %s1, 648
  %167 = vst [vmem:[%s166] sm:$0xff] %v165
  %s168 = scalar_lea.vmem %s0, 264
  %v169 = vld [vmem:[%s168] sm:$0xff]
  %s170 = scalar_lea.vmem %s1, 200
  %171 = vst [vmem:[%s170] sm:$0xff] %v169
  %s172 = scalar_lea.vmem %s0, 744
  %v173 = vld [vmem:[%s172] sm:$0xff]
  %s174 = scalar_lea.vmem %s1, 680
  %175 = vst [vmem:[%s174] sm:$0xff] %v173
  %s176 = scalar_lea.vmem %s0, 232
  %v177 = vld [vmem:[%s176] sm:$0xff]
  %s178 = scalar_lea.vmem %s1, 232
  %179 = vst [vmem:[%s178] sm:$0xff] %v177
  %s180 = scalar_lea.vmem %s0, 712
  %v181 = vld [vmem:[%s180] sm:$0xff]
  %s182 = scalar_lea.vmem %s1, 712
  %183 = vst [vmem:[%s182] sm:$0xff] %v181
  %s184 = scalar_lea.vmem %s0, 200
  %v185 = vld [vmem:[%s184] sm:$0xff]
  %s186 = scalar_lea.vmem %s1, 264
  %187 = vst [vmem:[%s186] sm:$0xff] %v185
  %s188 = scalar_lea.vmem %s0, 680
  %v189 = vld [vmem:[%s188] sm:$0xff]
  %s190 = scalar_lea.vmem %s1, 744
  %191 = vst [vmem:[%s190] sm:$0xff] %v189
  %s192 = scalar_lea.vmem %s0, 168
  %v193 = vld [vmem:[%s192] sm:$0xff]
  %s194 = scalar_lea.vmem %s1, 296
  %195 = vst [vmem:[%s194] sm:$0xff] %v193
  %s196 = scalar_lea.vmem %s0, 648
  %v197 = vld [vmem:[%s196] sm:$0xff]
  %s198 = scalar_lea.vmem %s1, 776
  %199 = vst [vmem:[%s198] sm:$0xff] %v197
  %s200 = scalar_lea.vmem %s0, 136
  %v201 = vld [vmem:[%s200] sm:$0xff]
  %s202 = scalar_lea.vmem %s1, 328
  %203 = vst [vmem:[%s202] sm:$0xff] %v201
  %s204 = scalar_lea.vmem %s0, 616
  %v205 = vld [vmem:[%s204] sm:$0xff]
  %s206 = scalar_lea.vmem %s1, 808
  %207 = vst [vmem:[%s206] sm:$0xff] %v205
  %s208 = scalar_lea.vmem %s0, 104
  %v209 = vld [vmem:[%s208] sm:$0xff]
  %s210 = scalar_lea.vmem %s1, 360
  %211 = vst [vmem:[%s210] sm:$0xff] %v209
  %s212 = scalar_lea.vmem %s0, 584
  %v213 = vld [vmem:[%s212] sm:$0xff]
  %s214 = scalar_lea.vmem %s1, 840
  %215 = vst [vmem:[%s214] sm:$0xff] %v213
  %s216 = scalar_lea.vmem %s0, 72
  %v217 = vld [vmem:[%s216] sm:$0xff]
  %s218 = scalar_lea.vmem %s1, 392
  %219 = vst [vmem:[%s218] sm:$0xff] %v217
  %s220 = scalar_lea.vmem %s0, 552
  %v221 = vld [vmem:[%s220] sm:$0xff]
  %s222 = scalar_lea.vmem %s1, 872
  %223 = vst [vmem:[%s222] sm:$0xff] %v221
  %s224 = scalar_lea.vmem %s0, 40
  %v225 = vld [vmem:[%s224] sm:$0xff]
  %s226 = scalar_lea.vmem %s1, 424
  %227 = vst [vmem:[%s226] sm:$0xff] %v225
  %s228 = scalar_lea.vmem %s0, 520
  %v229 = vld [vmem:[%s228] sm:$0xff]
  %s230 = scalar_lea.vmem %s1, 904
  %231 = vst [vmem:[%s230] sm:$0xff] %v229
  %s232 = scalar_lea.vmem %s0, 8
  %v233 = vld [vmem:[%s232] sm:$0xff]
  %s234 = scalar_lea.vmem %s1, 456
  %235 = vst [vmem:[%s234] sm:$0xff] %v233
  %s236 = scalar_lea.vmem %s0, 488
  %v237 = vld [vmem:[%s236] sm:$0xff]
  %s238 = scalar_lea.vmem %s1, 936
  %239 = vst [vmem:[%s238] sm:$0xff] %v237
  %s240 = scalar_lea.vmem %s0, 464
  %v241 = vld [vmem:[%s240] sm:$0xff]
  %s242 = scalar_lea.vmem %s1, 16
  %243 = vst [vmem:[%s242] sm:$0xff] %v241
  %s244 = scalar_lea.vmem %s0, 944
  %v245 = vld [vmem:[%s244] sm:$0xff]
  %s246 = scalar_lea.vmem %s1, 496
  %247 = vst [vmem:[%s246] sm:$0xff] %v245
  %s248 = scalar_lea.vmem %s0, 432
  %v249 = vld [vmem:[%s248] sm:$0xff]
  %s250 = scalar_lea.vmem %s1, 48
  %251 = vst [vmem:[%s250] sm:$0xff] %v249
  %s252 = scalar_lea.vmem %s0, 912
  %v253 = vld [vmem:[%s252] sm:$0xff]
  %s254 = scalar_lea.vmem %s1, 528
  %255 = vst [vmem:[%s254] sm:$0xff] %v253
  %s256 = scalar_lea.vmem %s0, 400
  %v257 = vld [vmem:[%s256] sm:$0xff]
  %s258 = scalar_lea.vmem %s1, 80
  %259 = vst [vmem:[%s258] sm:$0xff] %v257
  %s260 = scalar_lea.vmem %s0, 880
  %v261 = vld [vmem:[%s260] sm:$0xff]
  %s262 = scalar_lea.vmem %s1, 560
  %263 = vst [vmem:[%s262] sm:$0xff] %v261
  %s264 = scalar_lea.vmem %s0, 368
  %v265 = vld [vmem:[%s264] sm:$0xff]
  %s266 = scalar_lea.vmem %s1, 112
  %267 = vst [vmem:[%s266] sm:$0xff] %v265
  %s268 = scalar_lea.vmem %s0, 848
  %v269 = vld [vmem:[%s268] sm:$0xff]
  %s270 = scalar_lea.vmem %s1, 592
  %271 = vst [vmem:[%s270] sm:$0xff] %v269
  %s272 = scalar_lea.vmem %s0, 336
  %v273 = vld [vmem:[%s272] sm:$0xff]
  %s274 = scalar_lea.vmem %s1, 144
  %275 = vst [vmem:[%s274] sm:$0xff] %v273
  %s276 = scalar_lea.vmem %s0, 816
  %v277 = vld [vmem:[%s276] sm:$0xff]
  %s278 = scalar_lea.vmem %s1, 624
  %279 = vst [vmem:[%s278] sm:$0xff] %v277
  %s280 = scalar_lea.vmem %s0, 304
  %v281 = vld [vmem:[%s280] sm:$0xff]
  %s282 = scalar_lea.vmem %s1, 176
  %283 = vst [vmem:[%s282] sm:$0xff] %v281
  %s284 = scalar_lea.vmem %s0, 784
  %v285 = vld [vmem:[%s284] sm:$0xff]
  %s286 = scalar_lea.vmem %s1, 656
  %287 = vst [vmem:[%s286] sm:$0xff] %v285
  %s288 = scalar_lea.vmem %s0, 272
  %v289 = vld [vmem:[%s288] sm:$0xff]
  %s290 = scalar_lea.vmem %s1, 208
  %291 = vst [vmem:[%s290] sm:$0xff] %v289
  %s292 = scalar_lea.vmem %s0, 752
  %v293 = vld [vmem:[%s292] sm:$0xff]
  %s294 = scalar_lea.vmem %s1, 688
  %295 = vst [vmem:[%s294] sm:$0xff] %v293
  %s296 = scalar_lea.vmem %s0, 240
  %v297 = vld [vmem:[%s296] sm:$0xff]
  %s298 = scalar_lea.vmem %s1, 240
  %299 = vst [vmem:[%s298] sm:$0xff] %v297
  %s300 = scalar_lea.vmem %s0, 720
  %v301 = vld [vmem:[%s300] sm:$0xff]
  %s302 = scalar_lea.vmem %s1, 720
  %303 = vst [vmem:[%s302] sm:$0xff] %v301
  %s304 = scalar_lea.vmem %s0, 208
  %v305 = vld [vmem:[%s304] sm:$0xff]
  %s306 = scalar_lea.vmem %s1, 272
  %307 = vst [vmem:[%s306] sm:$0xff] %v305
  %s308 = scalar_lea.vmem %s0, 688
  %v309 = vld [vmem:[%s308] sm:$0xff]
  %s310 = scalar_lea.vmem %s1, 752
  %311 = vst [vmem:[%s310] sm:$0xff] %v309
  %s312 = scalar_lea.vmem %s0, 176
  %v313 = vld [vmem:[%s312] sm:$0xff]
  %s314 = scalar_lea.vmem %s1, 304
  %315 = vst [vmem:[%s314] sm:$0xff] %v313
  %s316 = scalar_lea.vmem %s0, 656
  %v317 = vld [vmem:[%s316] sm:$0xff]
  %s318 = scalar_lea.vmem %s1, 784
  %319 = vst [vmem:[%s318] sm:$0xff] %v317
  %s320 = scalar_lea.vmem %s0, 144
  %v321 = vld [vmem:[%s320] sm:$0xff]
  %s322 = scalar_lea.vmem %s1, 336
  %323 = vst [vmem:[%s322] sm:$0xff] %v321
  %s324 = scalar_lea.vmem %s0, 624
  %v325 = vld [vmem:[%s324] sm:$0xff]
  %s326 = scalar_lea.vmem %s1, 816
  %327 = vst [vmem:[%s326] sm:$0xff] %v325
  %s328 = scalar_lea.vmem %s0, 112
  %v329 = vld [vmem:[%s328] sm:$0xff]
  %s330 = scalar_lea.vmem %s1, 368
  %331 = vst [vmem:[%s330] sm:$0xff] %v329
  %s332 = scalar_lea.vmem %s0, 592
  %v333 = vld [vmem:[%s332] sm:$0xff]
  %s334 = scalar_lea.vmem %s1, 848
  %335 = vst [vmem:[%s334] sm:$0xff] %v333
  %s336 = scalar_lea.vmem %s0, 80
  %v337 = vld [vmem:[%s336] sm:$0xff]
  %s338 = scalar_lea.vmem %s1, 400
  %339 = vst [vmem:[%s338] sm:$0xff] %v337
  %s340 = scalar_lea.vmem %s0, 560
  %v341 = vld [vmem:[%s340] sm:$0xff]
  %s342 = scalar_lea.vmem %s1, 880
  %343 = vst [vmem:[%s342] sm:$0xff] %v341
  %s344 = scalar_lea.vmem %s0, 48
  %v345 = vld [vmem:[%s344] sm:$0xff]
  %s346 = scalar_lea.vmem %s1, 432
  %347 = vst [vmem:[%s346] sm:$0xff] %v345
  %s348 = scalar_lea.vmem %s0, 528
  %v349 = vld [vmem:[%s348] sm:$0xff]
  %s350 = scalar_lea.vmem %s1, 912
  %351 = vst [vmem:[%s350] sm:$0xff] %v349
  %s352 = scalar_lea.vmem %s0, 16
  %v353 = vld [vmem:[%s352] sm:$0xff]
  %s354 = scalar_lea.vmem %s1, 464
  %355 = vst [vmem:[%s354] sm:$0xff] %v353
  %s356 = scalar_lea.vmem %s0, 496
  %v357 = vld [vmem:[%s356] sm:$0xff]
  %s358 = scalar_lea.vmem %s1, 944
  %359 = vst [vmem:[%s358] sm:$0xff] %v357
  %s360 = scalar_lea.vmem %s0, 472
  %v361 = vld [vmem:[%s360] sm:$0xff]
  %s362 = scalar_lea.vmem %s1, 24
  %363 = vst [vmem:[%s362] sm:$0xff] %v361
  %s364 = scalar_lea.vmem %s0, 952
  %v365 = vld [vmem:[%s364] sm:$0xff]
  %s366 = scalar_lea.vmem %s1, 504
  %367 = vst [vmem:[%s366] sm:$0xff] %v365
  %s368 = scalar_lea.vmem %s0, 440
  %v369 = vld [vmem:[%s368] sm:$0xff]
  %s370 = scalar_lea.vmem %s1, 56
  %371 = vst [vmem:[%s370] sm:$0xff] %v369
  %s372 = scalar_lea.vmem %s0, 920
  %v373 = vld [vmem:[%s372] sm:$0xff]
  %s374 = scalar_lea.vmem %s1, 536
  %375 = vst [vmem:[%s374] sm:$0xff] %v373
  %s376 = scalar_lea.vmem %s0, 408
  %v377 = vld [vmem:[%s376] sm:$0xff]
  %s378 = scalar_lea.vmem %s1, 88
  %379 = vst [vmem:[%s378] sm:$0xff] %v377
  %s380 = scalar_lea.vmem %s0, 888
  %v381 = vld [vmem:[%s380] sm:$0xff]
  %s382 = scalar_lea.vmem %s1, 568
  %383 = vst [vmem:[%s382] sm:$0xff] %v381
  %s384 = scalar_lea.vmem %s0, 376
  %v385 = vld [vmem:[%s384] sm:$0xff]
  %s386 = scalar_lea.vmem %s1, 120
  %387 = vst [vmem:[%s386] sm:$0xff] %v385
  %s388 = scalar_lea.vmem %s0, 856
  %v389 = vld [vmem:[%s388] sm:$0xff]
  %s390 = scalar_lea.vmem %s1, 600
  %391 = vst [vmem:[%s390] sm:$0xff] %v389
  %s392 = scalar_lea.vmem %s0, 344
  %v393 = vld [vmem:[%s392] sm:$0xff]
  %s394 = scalar_lea.vmem %s1, 152
  %395 = vst [vmem:[%s394] sm:$0xff] %v393
  %s396 = scalar_lea.vmem %s0, 824
  %v397 = vld [vmem:[%s396] sm:$0xff]
  %s398 = scalar_lea.vmem %s1, 632
  %399 = vst [vmem:[%s398] sm:$0xff] %v397
  %s400 = scalar_lea.vmem %s0, 312
  %v401 = vld [vmem:[%s400] sm:$0xff]
  %s402 = scalar_lea.vmem %s1, 184
  %403 = vst [vmem:[%s402] sm:$0xff] %v401
  %s404 = scalar_lea.vmem %s0, 792
  %v405 = vld [vmem:[%s404] sm:$0xff]
  %s406 = scalar_lea.vmem %s1, 664
  %407 = vst [vmem:[%s406] sm:$0xff] %v405
  %s408 = scalar_lea.vmem %s0, 280
  %v409 = vld [vmem:[%s408] sm:$0xff]
  %s410 = scalar_lea.vmem %s1, 216
  %411 = vst [vmem:[%s410] sm:$0xff] %v409
  %s412 = scalar_lea.vmem %s0, 760
  %v413 = vld [vmem:[%s412] sm:$0xff]
  %s414 = scalar_lea.vmem %s1, 696
  %415 = vst [vmem:[%s414] sm:$0xff] %v413
  %s416 = scalar_lea.vmem %s0, 248
  %v417 = vld [vmem:[%s416] sm:$0xff]
  %s418 = scalar_lea.vmem %s1, 248
  %419 = vst [vmem:[%s418] sm:$0xff] %v417
  %s420 = scalar_lea.vmem %s0, 728
  %v421 = vld [vmem:[%s420] sm:$0xff]
  %s422 = scalar_lea.vmem %s1, 728
  %423 = vst [vmem:[%s422] sm:$0xff] %v421
  %s424 = scalar_lea.vmem %s0, 216
  %v425 = vld [vmem:[%s424] sm:$0xff]
  %s426 = scalar_lea.vmem %s1, 280
  %427 = vst [vmem:[%s426] sm:$0xff] %v425
  %s428 = scalar_lea.vmem %s0, 696
  %v429 = vld [vmem:[%s428] sm:$0xff]
  %s430 = scalar_lea.vmem %s1, 760
  %431 = vst [vmem:[%s430] sm:$0xff] %v429
  %s432 = scalar_lea.vmem %s0, 184
  %v433 = vld [vmem:[%s432] sm:$0xff]
  %s434 = scalar_lea.vmem %s1, 312
  %435 = vst [vmem:[%s434] sm:$0xff] %v433
  %s436 = scalar_lea.vmem %s0, 664
  %v437 = vld [vmem:[%s436] sm:$0xff]
  %s438 = scalar_lea.vmem %s1, 792
  %439 = vst [vmem:[%s438] sm:$0xff] %v437
  %s440 = scalar_lea.vmem %s0, 152
  %v441 = vld [vmem:[%s440] sm:$0xff]
  %s442 = scalar_lea.vmem %s1, 344
  %443 = vst [vmem:[%s442] sm:$0xff] %v441
  %s444 = scalar_lea.vmem %s0, 632
  %v445 = vld [vmem:[%s444] sm:$0xff]
  %s446 = scalar_lea.vmem %s1, 824
  %447 = vst [vmem:[%s446] sm:$0xff] %v445
  %s448 = scalar_lea.vmem %s0, 120
  %v449 = vld [vmem:[%s448] sm:$0xff]
  %s450 = scalar_lea.vmem %s1, 376
  %451 = vst [vmem:[%s450] sm:$0xff] %v449
  %s452 = scalar_lea.vmem %s0, 600
  %v453 = vld [vmem:[%s452] sm:$0xff]
  %s454 = scalar_lea.vmem %s1, 856
  %455 = vst [vmem:[%s454] sm:$0xff] %v453
  %s456 = scalar_lea.vmem %s0, 88
  %v457 = vld [vmem:[%s456] sm:$0xff]
  %s458 = scalar_lea.vmem %s1, 408
  %459 = vst [vmem:[%s458] sm:$0xff] %v457
  %s460 = scalar_lea.vmem %s0, 568
  %v461 = vld [vmem:[%s460] sm:$0xff]
  %s462 = scalar_lea.vmem %s1, 888
  %463 = vst [vmem:[%s462] sm:$0xff] %v461
  %s464 = scalar_lea.vmem %s0, 56
  %v465 = vld [vmem:[%s464] sm:$0xff]
  %s466 = scalar_lea.vmem %s1, 440
  %467 = vst [vmem:[%s466] sm:$0xff] %v465
  %s468 = scalar_lea.vmem %s0, 536
  %v469 = vld [vmem:[%s468] sm:$0xff]
  %s470 = scalar_lea.vmem %s1, 920
  %471 = vst [vmem:[%s470] sm:$0xff] %v469
  %s472 = scalar_lea.vmem %s0, 24
  %v473 = vld [vmem:[%s472] sm:$0xff]
  %s474 = scalar_lea.vmem %s1, 472
  %475 = vst [vmem:[%s474] sm:$0xff] %v473
  %s476 = scalar_lea.vmem %s0, 504
  %v477 = vld [vmem:[%s476] sm:$0xff]
  %s478 = scalar_lea.vmem %s1, 952
  %479 = vst [vmem:[%s478] sm:$0xff] %v477

</llo_original>
